<compile_context>
chip_gen: v7x
topology: tpu7x:2x2x1
jax: 0.10.0
libtpu: 0.0.40
codegen_flags: <defaults>
</compile_context>

<pallas_src>
import jax
import jax.numpy as jnp
from jax.experimental import pallas as pl
from jax.experimental.pallas import tpu as pltpu


# ---------------------------------------------------------------------------
# helpers
# ---------------------------------------------------------------------------
def _round_up(x, m):
    return (x + m - 1) // m * m


def _pick_tm(m):
    """Row-tile size: big (multiple of 256) when M is large, otherwise split
    M into >=2 grid steps (v7x has 2 TensorCores). Always a multiple of 16
    (bf16 sublane tile) unless the block covers the whole padded array."""
    m8 = _round_up(m, 8)
    if m8 >= 1024:
        return 512
    if m8 >= 512:
        return 256
    if m8 >= 16:
        return _round_up((m8 + 1) // 2, 16)
    return m8


def _skip_to_carried_layout(skip_nhwc, stage):
    """(N, 2^(s+1)H0, 2^(s+1)W0, C) -> (N*H0*W0, 4^(s+1)*C) with row order
    (n,h0,w0) and column order (dh0,dw0,dh1,dw1,...,dh_s,dw_s,c)."""
    N, H, W, C = skip_nhwc.shape
    f = 2 ** (stage + 1)
    H0, W0 = H // f, W // f
    x = skip_nhwc.reshape(
        (N, H0) + (2,) * (stage + 1) + (W0,) + (2,) * (stage + 1) + (C,))
    perm = [0, 1, 3 + stage]
    for t in range(stage + 1):
        perm += [2 + t, 4 + stage + t]
    perm += [5 + 2 * stage]
    x = jnp.transpose(x, perm)
    return x.reshape(N * H0 * W0, (4 ** (stage + 1)) * C)


def _carried_to_nhwc(flat, N, H0, W0, n_up, C):
    """(N*H0*W0, 4^n_up * C) carried layout -> (N, 2^n_up*H0, 2^n_up*W0, C)."""
    x = flat.reshape((N, H0, W0) + (2, 2) * n_up + (C,))
    perm = ([0, 1] + [3 + 2 * t for t in range(n_up)]
            + [2] + [4 + 2 * t for t in range(n_up)] + [3 + 2 * n_up])
    x = jnp.transpose(x, perm)
    f = 2 ** n_up
    return x.reshape(N, f * H0, f * W0, C)


# ---------------------------------------------------------------------------
# Pallas kernel: fully fused decoder (chain of matmul + bias + skip, then 1x1)
# ---------------------------------------------------------------------------
def _make_decoder_kernel(n_up):
    def kernel(*refs):
        # refs = [x0, (w_blk, bias, skip) * n_up, w_conv_blk, b_conv, out]
        x_ref = refs[0]
        o_ref = refs[-1]
        h = x_ref[...]                                        # bf16 (TM, C0)
        for s in range(n_up):
            w_ref = refs[1 + 3 * s]
            b_ref = refs[2 + 3 * s]
            s_ref = refs[3 + 3 * s]
            acc = jnp.dot(h, w_ref[...], preferred_element_type=jnp.float32)
            # bias / skip adds stay in f32 (v5e has no bf16 VPU path)
            acc = acc + b_ref[...] + s_ref[...].astype(jnp.float32)
            h = acc.astype(jnp.bfloat16)                      # bf16 operand for next MXU matmul
        wc_ref = refs[1 + 3 * n_up]
        bc_ref = refs[2 + 3 * n_up]
        out = jnp.dot(h, wc_ref[...], preferred_element_type=jnp.float32)
        o_ref[...] = out + bc_ref[...]
    return kernel


# ---------------------------------------------------------------------------
# fcn_Decoder forward
# ---------------------------------------------------------------------------
def fcn_decoder_forward(xs_nchw, params):
    """xs_nchw: list of NCHW feature maps [x0 (deepest), x1, ..., x_{depth-1}]."""
    xs = [jnp.transpose(x, (0, 2, 3, 1)) for x in xs_nchw]    # NCHW -> NHWC
    n_up = len(params["up"])
    N, H0, W0, C0 = xs[0].shape
    M = N * H0 * W0

    tm = _pick_tm(M)
    m_pad = _round_up(M, tm)

    def pad_rows(a):
        if a.shape[0] == m_pad:
            return a
        return jnp.pad(a, ((0, m_pad - a.shape[0]), (0, 0)))

    operands = [pad_rows(xs[0].reshape(M, C0).astype(jnp.bfloat16))]
    in_specs = [pl.BlockSpec((tm, C0), lambda i: (i, 0))]

    for s, (w, b) in enumerate(params["up"]):
        cin, cout = w.shape[0], w.shape[1]
        # (cin, cout, 2, 2) -> (cin, (dh, dw, cout))
        wm = jnp.transpose(w, (0, 2, 3, 1)).reshape(cin, 4 * cout)
        # block-diagonal expansion over the 4^s carried sub-blocks
        w_blk = jnp.kron(jnp.eye(4 ** s, dtype=wm.dtype), wm)
        b_row = jnp.tile(b, 4 ** (s + 1)).reshape(1, -1).astype(jnp.float32)
        skip = pad_rows(_skip_to_carried_layout(xs[s + 1], s).astype(jnp.bfloat16))
        operands += [w_blk.astype(jnp.bfloat16), b_row, skip]
        kw, nw = w_blk.shape
        in_specs += [
            pl.BlockSpec((kw, nw), lambda i: (0, 0)),   # weight: VMEM-resident
            pl.BlockSpec((1, nw), lambda i: (0, 0)),    # bias row
            pl.BlockSpec((tm, nw), lambda i: (i, 0)),   # permuted skip tile
        ]

    cw, cb = params["conv"]
    out_ch, c_last = cw.shape[0], cw.shape[1]
    wc = cw.reshape(out_ch, c_last).T                          # (c_last, out_ch)
    wc_blk = jnp.kron(jnp.eye(4 ** n_up, dtype=wc.dtype), wc)
    bc_row = jnp.tile(cb, 4 ** n_up).reshape(1, -1).astype(jnp.float32)
    operands += [wc_blk.astype(jnp.bfloat16), bc_row]
    kc, nc = wc_blk.shape
    in_specs += [pl.BlockSpec((kc, nc), lambda i: (0, 0)),
                 pl.BlockSpec((1, nc), lambda i: (0, 0))]

    out_flat = pl.pallas_call(
        _make_decoder_kernel(n_up),
        out_shape=jax.ShapeDtypeStruct((m_pad, nc), jnp.float32),
        grid=(m_pad // tm,),
        in_specs=in_specs,
        out_specs=pl.BlockSpec((tm, nc), lambda i: (i, 0)),
        compiler_params=pltpu.CompilerParams(dimension_semantics=("parallel",)),
    )(*operands)

    out_flat = out_flat[:M]
    out_nhwc = _carried_to_nhwc(out_flat, N, H0, W0, n_up, out_ch)
    return jnp.transpose(out_nhwc, (0, 3, 1, 2))               # NHWC -> NCHW


def init_params(key, in_channels, out_channels, depth, basewidth):
    """Deterministic synthetic weights matching fcn_Decoder.__init__ shapes."""
    up, cin, conv = [], in_channels, None
    for i in range(depth):
        key, k1, k2 = jax.random.split(key, 3)
        if i != depth - 1:
            cout = basewidth * 2 ** (depth - 1 - i - 1)
            w = jax.random.normal(k1, (cin, cout, 2, 2), jnp.float32) * 0.1
            b = jax.random.normal(k2, (cout,), jnp.float32) * 0.1
            up.append((w, b))
            cin = cout
        else:
            w = jax.random.normal(k1, (out_channels, cin, 1, 1), jnp.float32) * 0.1
            b = jax.random.normal(k2, (out_channels,), jnp.float32) * 0.1
            conv = (w, b)
    return {"up": up, "conv": conv}


# ---------------------------------------------------------------------------
# Pure-JAX (f32, XLA) reference of the same semantics for a correctness check
# ---------------------------------------------------------------------------
def _ref_forward(xs_nchw, params):
    xs = [jnp.transpose(x, (0, 2, 3, 1)) for x in xs_nchw]
    out = xs[0]
    for i, (w, b) in enumerate(params["up"]):
        N, H, W, _ = out.shape
        Cout = w.shape[1]
        y = jnp.einsum("nhwi,iojk->nhjwko", out, w)            # (N,H,2,W,2,Cout)
        out = y.reshape(N, 2 * H, 2 * W, Cout) + b + xs[i + 1]
    cw, cb = params["conv"]
    out = jnp.einsum("nhwi,oi->nhwo", out, cw.reshape(cw.shape[0], -1)) + cb
    return jnp.transpose(out, (0, 3, 1, 2))


if __name__ == "__main__":
    # Small config: depth=3, basewidth=4, in_channels=16, out_channels=3
    in_channels, out_channels, depth, basewidth = 16, 3, 3, 4
    batch, h0, w0 = 2, 8, 8

    key = jax.random.PRNGKey(0)
    key, kp = jax.random.split(key)
    params = init_params(kp, in_channels, out_channels, depth, basewidth)

    # Skip-connection pyramid x[0] (deepest) ... x[depth-1] (shallowest)
    xs, c, h, w = [], in_channels, h0, w0
    for i in range(depth):
        key, kx = jax.random.split(key)
        xs.append(jax.random.normal(kx, (batch, c, h, w), jnp.float32))
        if i != depth - 1:
            c = basewidth * 2 ** (depth - 1 - i - 1)
            h, w = 2 * h, 2 * w

    out = jax.block_until_ready(fcn_decoder_forward(xs, params))
    ref = jax.block_until_ready(_ref_forward(xs, params))

    assert out.shape == (batch, out_channels, h0 * 4, w0 * 4), out.shape
    # bf16 MXU operands with f32 accumulation -> loose-ish tolerance vs f32 ref
    max_err = float(jnp.max(jnp.abs(out - ref)))
    assert jnp.allclose(out, ref, atol=5e-2, rtol=5e-2), max_err
    print("KERNEL_OK")
</pallas_src>

<mosaic_0001>
module attributes {stable_mosaic.version = 11 : i64} {
  func.func @kernel(%arg0: i32, %arg1: memref<64x16xbf16, #tpu.memory_space<vmem>>, %arg2: memref<16x32xbf16, #tpu.memory_space<vmem>>, %arg3: memref<1x32xf32, #tpu.memory_space<vmem>>, %arg4: memref<64x32xbf16, #tpu.memory_space<vmem>>, %arg5: memref<32x64xbf16, #tpu.memory_space<vmem>>, %arg6: memref<1x64xf32, #tpu.memory_space<vmem>>, %arg7: memref<64x64xbf16, #tpu.memory_space<vmem>>, %arg8: memref<64x48xbf16, #tpu.memory_space<vmem>>, %arg9: memref<1x48xf32, #tpu.memory_space<vmem>>, %arg10: memref<64x48xf32, #tpu.memory_space<vmem>>) attributes {dimension_semantics = [#tpu.dimension_semantics<parallel>], iteration_bounds = array<i64: 2>, scalar_prefetch = 0 : i64, scratch_operands = 0 : i64, tpu.core_type = #tpu.core_type<tc>, window_params = [{transform_indices = @transform_0, window_bounds = array<i64: 64, 16>}, {pipeline_mode = #tpu.pipeline_mode<synchronous>, transform_indices = @transform_1, window_bounds = array<i64: 16, 32>}, {pipeline_mode = #tpu.pipeline_mode<synchronous>, transform_indices = @transform_2, window_bounds = array<i64: 1, 32>}, {transform_indices = @transform_3, window_bounds = array<i64: 64, 32>}, {pipeline_mode = #tpu.pipeline_mode<synchronous>, transform_indices = @transform_4, window_bounds = array<i64: 32, 64>}, {pipeline_mode = #tpu.pipeline_mode<synchronous>, transform_indices = @transform_5, window_bounds = array<i64: 1, 64>}, {transform_indices = @transform_6, window_bounds = array<i64: 64, 64>}, {pipeline_mode = #tpu.pipeline_mode<synchronous>, transform_indices = @transform_7, window_bounds = array<i64: 64, 48>}, {pipeline_mode = #tpu.pipeline_mode<synchronous>, transform_indices = @transform_8, window_bounds = array<i64: 1, 48>}, {transform_indices = @transform_9, window_bounds = array<i64: 64, 48>}]} {
    %c0 = arith.constant 0 : index
    %c0_0 = arith.constant 0 : index
    %0 = vector.load %arg1[%c0, %c0_0] : memref<64x16xbf16, #tpu.memory_space<vmem>>, vector<64x16xbf16>
    %c0_1 = arith.constant 0 : index
    %c0_2 = arith.constant 0 : index
    %1 = vector.load %arg2[%c0_1, %c0_2] : memref<16x32xbf16, #tpu.memory_space<vmem>>, vector<16x32xbf16>
    %cst = arith.constant dense<0.000000e+00> : vector<64x32xf32>
    %2 = tpu.matmul %0, %1, %cst {dimension_numbers = #tpu.dot_dimension_numbers<[1], [0], [0], [1], [0, 0, 1, 1], [], []>} : vector<64x16xbf16>, vector<16x32xbf16>, vector<64x32xf32> -> vector<64x32xf32>
    %c0_3 = arith.constant 0 : index
    %c0_4 = arith.constant 0 : index
    %3 = vector.load %arg3[%c0_3, %c0_4] : memref<1x32xf32, #tpu.memory_space<vmem>>, vector<1x32xf32>
    %4 = vector.broadcast %3 : vector<1x32xf32> to vector<64x32xf32>
    %5 = arith.addf %2, %4 : vector<64x32xf32>
    %c0_5 = arith.constant 0 : index
    %c0_6 = arith.constant 0 : index
    %6 = vector.load %arg4[%c0_5, %c0_6] : memref<64x32xbf16, #tpu.memory_space<vmem>>, vector<64x32xbf16>
    %7 = arith.extf %6 : vector<64x32xbf16> to vector<64x32xf32>
    %8 = arith.addf %5, %7 : vector<64x32xf32>
    %9 = arith.truncf %8 : vector<64x32xf32> to vector<64x32xbf16>
    %c0_7 = arith.constant 0 : index
    %c0_8 = arith.constant 0 : index
    %10 = vector.load %arg5[%c0_7, %c0_8] : memref<32x64xbf16, #tpu.memory_space<vmem>>, vector<32x64xbf16>
    %cst_9 = arith.constant dense<0.000000e+00> : vector<64x64xf32>
    %11 = tpu.matmul %9, %10, %cst_9 {dimension_numbers = #tpu.dot_dimension_numbers<[1], [0], [0], [1], [0, 0, 1, 1], [], []>} : vector<64x32xbf16>, vector<32x64xbf16>, vector<64x64xf32> -> vector<64x64xf32>
    %c0_10 = arith.constant 0 : index
    %c0_11 = arith.constant 0 : index
    %12 = vector.load %arg6[%c0_10, %c0_11] : memref<1x64xf32, #tpu.memory_space<vmem>>, vector<1x64xf32>
    %13 = vector.broadcast %12 : vector<1x64xf32> to vector<64x64xf32>
    %14 = arith.addf %11, %13 : vector<64x64xf32>
    %c0_12 = arith.constant 0 : index
    %c0_13 = arith.constant 0 : index
    %15 = vector.load %arg7[%c0_12, %c0_13] : memref<64x64xbf16, #tpu.memory_space<vmem>>, vector<64x64xbf16>
    %16 = arith.extf %15 : vector<64x64xbf16> to vector<64x64xf32>
    %17 = arith.addf %14, %16 : vector<64x64xf32>
    %18 = arith.truncf %17 : vector<64x64xf32> to vector<64x64xbf16>
    %c0_14 = arith.constant 0 : index
    %c0_15 = arith.constant 0 : index
    %19 = vector.load %arg8[%c0_14, %c0_15] : memref<64x48xbf16, #tpu.memory_space<vmem>>, vector<64x48xbf16>
    %cst_16 = arith.constant dense<0.000000e+00> : vector<64x48xf32>
    %20 = tpu.matmul %18, %19, %cst_16 {dimension_numbers = #tpu.dot_dimension_numbers<[1], [0], [0], [1], [0, 0, 1, 1], [], []>} : vector<64x64xbf16>, vector<64x48xbf16>, vector<64x48xf32> -> vector<64x48xf32>
    %c0_17 = arith.constant 0 : index
    %c0_18 = arith.constant 0 : index
    %21 = vector.load %arg9[%c0_17, %c0_18] : memref<1x48xf32, #tpu.memory_space<vmem>>, vector<1x48xf32>
    %22 = vector.broadcast %21 : vector<1x48xf32> to vector<64x48xf32>
    %23 = arith.addf %20, %22 : vector<64x48xf32>
    %c0_19 = arith.constant 0 : index
    %c0_20 = arith.constant 0 : index
    %24 = vector.load %arg10[%c0_19, %c0_20] : memref<64x48xf32, #tpu.memory_space<vmem>>, vector<64x48xf32>
    tpu.vector_store %arg10[%c0_19, %c0_20], %23 {strides = array<i32>} : memref<64x48xf32, #tpu.memory_space<vmem>>, vector<64x48xf32>,
    return
  }
  func.func @transform_0(%arg0: i32) -> (i32, i32) {
    %c0_i32 = arith.constant 0 : i32
    %c0_i32_0 = arith.constant 0 : i32
    return %arg0, %c0_i32 : i32, i32
  }
  func.func @transform_1(%arg0: i32) -> (i32, i32) {
    %c0_i32 = arith.constant 0 : i32
    %c0_i32_0 = arith.constant 0 : i32
    %c0_i32_1 = arith.constant 0 : i32
    return %c0_i32, %c0_i32_0 : i32, i32
  }
  func.func @transform_2(%arg0: i32) -> (i32, i32) {
    %c0_i32 = arith.constant 0 : i32
    %c0_i32_0 = arith.constant 0 : i32
    %c0_i32_1 = arith.constant 0 : i32
    return %c0_i32, %c0_i32_0 : i32, i32
  }
  func.func @transform_3(%arg0: i32) -> (i32, i32) {
    %c0_i32 = arith.constant 0 : i32
    %c0_i32_0 = arith.constant 0 : i32
    return %arg0, %c0_i32 : i32, i32
  }
  func.func @transform_4(%arg0: i32) -> (i32, i32) {
    %c0_i32 = arith.constant 0 : i32
    %c0_i32_0 = arith.constant 0 : i32
    %c0_i32_1 = arith.constant 0 : i32
    return %c0_i32, %c0_i32_0 : i32, i32
  }
  func.func @transform_5(%arg0: i32) -> (i32, i32) {
    %c0_i32 = arith.constant 0 : i32
    %c0_i32_0 = arith.constant 0 : i32
    %c0_i32_1 = arith.constant 0 : i32
    return %c0_i32, %c0_i32_0 : i32, i32
  }
  func.func @transform_6(%arg0: i32) -> (i32, i32) {
    %c0_i32 = arith.constant 0 : i32
    %c0_i32_0 = arith.constant 0 : i32
    return %arg0, %c0_i32 : i32, i32
  }
  func.func @transform_7(%arg0: i32) -> (i32, i32) {
    %c0_i32 = arith.constant 0 : i32
    %c0_i32_0 = arith.constant 0 : i32
    %c0_i32_1 = arith.constant 0 : i32
    return %c0_i32, %c0_i32_0 : i32, i32
  }
  func.func @transform_8(%arg0: i32) -> (i32, i32) {
    %c0_i32 = arith.constant 0 : i32
    %c0_i32_0 = arith.constant 0 : i32
    %c0_i32_1 = arith.constant 0 : i32
    return %c0_i32, %c0_i32_0 : i32, i32
  }
  func.func @transform_9(%arg0: i32) -> (i32, i32) {
    %c0_i32 = arith.constant 0 : i32
    %c0_i32_0 = arith.constant 0 : i32
    return %arg0, %c0_i32 : i32, i32
  }
}

</mosaic_0001>

<llo_original>
// kernel: tpu_custom_call.1
$region0: #{tpu_custom_call.1}
  #allocation0 [shape = 'u32[]', space=smem, size = 0x4, offset = 0x4, fixed_abs, tag = 'smem constant byte address 0x4 - core index']
  #allocation1 [shape = 'u32[144,128]{1,0:T(1,128)}', space=vmem, size = 0x12000, scoped, tag = 'internal scratch']
  %s0 = inlined_call_operand.vmem [shape: bf16[128,16], index: 0, kind: input, shape index: {}]
  %s1 = inlined_call_operand.vmem [shape: bf16[16,32], index: 1, kind: input, shape index: {}]
  %s2 = inlined_call_operand.vmem [shape: f32[1,32], index: 2, kind: input, shape index: {}]
  %s3 = inlined_call_operand.vmem [shape: bf16[128,32], index: 3, kind: input, shape index: {}]
  %s4 = inlined_call_operand.vmem [shape: bf16[32,64], index: 4, kind: input, shape index: {}]
  %s5 = inlined_call_operand.vmem [shape: f32[1,64], index: 5, kind: input, shape index: {}]
  %s6 = inlined_call_operand.vmem [shape: bf16[128,64], index: 6, kind: input, shape index: {}]
  %s7 = inlined_call_operand.vmem [shape: bf16[64,48], index: 7, kind: input, shape index: {}]
  %s8 = inlined_call_operand.vmem [shape: f32[1,48], index: 8, kind: input, shape index: {}]
  %s9 = inlined_call_operand.vmem [shape: f32[128,48], index: 9, kind: output, shape index: {}]
  %s10 = sld [smem:[#allocation0]]
  $region69: #{tpu_custom_call.1} parent=0
    _
  %s12 = ssub.s32 1, %s10
  %s13 = scalar_select 0, %s12, %s10
  loop: start=0, step=1, limit=4
  $region2: #{tpu_custom_call.1} parent=0 // loop_pre_header
    _
  $region3: #{tpu_custom_call.1} parent=0 // loop_header
    %s15 = sphi 0, %s19
    %p16 = scmp.ge.s32.totalorder %s15, 4
    %s25 = sphi 0, %s27
    %s28 = sphi 0, %s25
    %s29 = sphi 0, %s28
    %s45 = sphi 0, %s29
    %s49 = sphi 0, %s49
    %s51 = sphi 0, %s49
    %s52 = sphi 0, %s51
    %s66 = sphi 0, %s52
    %s70 = sphi 0, %s70
    %s72 = sphi 0, %s70
    %s73 = sphi 0, %s72
    %s87 = sphi 0, %s73
    %s93 = sphi 0, %s95
    %s96 = sphi 0, %s93
    %s97 = sphi 0, %s96
    %s113 = sphi 0, %s97
    %s117 = sphi 0, %s117
    %s119 = sphi 0, %s117
    %s120 = sphi 0, %s119
    %s134 = sphi 0, %s120
    %s138 = sphi 0, %s138
    %s140 = sphi 0, %s138
    %s141 = sphi 0, %s140
    %s155 = sphi 0, %s141
    %s161 = sphi 0, %s163
    %s164 = sphi 0, %s161
    %s165 = sphi 0, %s164
    %s181 = sphi 0, %s165
    %s185 = sphi 0, %s185
    %s187 = sphi 0, %s185
    %s188 = sphi 0, %s187
    %s202 = sphi 0, %s188
    %s206 = sphi 0, %s206
    %s208 = sphi 0, %s206
    %s209 = sphi 0, %s208
    %s223 = sphi 0, %s209
    %s229 = sphi 0, %s231
    %s232 = sphi 0, %s229
    %s233 = sphi 0, %s232
    %s249 = sphi 0, %s233
  $region4: #{tpu_custom_call.1} parent=0 // loop_header_branch
    %18 = sbr.rel (%p16) target = $region8
  $region5: #{tpu_custom_call.1} parent=0 // loop_body
    %s20 = ssub.s32 %s15, 1
    %s21 = ssub.s32 %s15, 2
    %s22 = sadd.s32 %s15, 1
    %s23 = ssub.s32 %s15, %s22
    %p24 = scmp.eq.s32.totalorder %s23, 0
    %s26 = sadd.s32 %s25, 1
    %s27 = scalar_select %p24, %s25, %s26
    %p30 = pneg %p24
    %p31 = scmp.eq.s32.totalorder %s15, 1
    %p32 = por %p30, %p31
    %p33 = scmp.ne.s32.totalorder %s25, %s28
    %p34 = scmp.eq.s32.totalorder %s15, 0
    %p35 = por %p33, %p34
    %p36 = scmp.ne.s32.totalorder %s25, %s28
    %p37 = scmp.eq.s32.totalorder %s20, 1
    %p38 = por %p36, %p37
    %p39 = scmp.ne.s32.totalorder %s28, %s29
    %p40 = scmp.eq.s32.totalorder %s20, 0
    %p41 = por %p39, %p40
    %p42 = scmp.ne.s32.totalorder %s28, %s29
    %p43 = scmp.eq.s32.totalorder %s21, 1
    %p44 = por %p42, %p43
    %p46 = scmp.ne.s32.totalorder %s29, %s45
    %p47 = scmp.eq.s32.totalorder %s21, 0
    %p48 = por %p46, %p47
    %s50 = sadd.s32 %s49, 1
    %p53 = scmp.eq.s32.totalorder %s15, 1
    %p54 = scmp.ne.s32.totalorder %s49, %s51
    %p55 = scmp.eq.s32.totalorder %s15, 0
    %p56 = por %p54, %p55
    %p57 = scmp.ne.s32.totalorder %s49, %s51
    %p58 = scmp.eq.s32.totalorder %s20, 1
    %p59 = por %p57, %p58
    %p60 = scmp.ne.s32.totalorder %s51, %s52
    %p61 = scmp.eq.s32.totalorder %s20, 0
    %p62 = por %p60, %p61
    %p63 = scmp.ne.s32.totalorder %s51, %s52
    %p64 = scmp.eq.s32.totalorder %s21, 1
    %p65 = por %p63, %p64
    %p67 = scmp.ne.s32.totalorder %s52, %s66
    %p68 = scmp.eq.s32.totalorder %s21, 0
    %p69 = por %p67, %p68
    %s71 = sadd.s32 %s70, 1
    %p74 = scmp.eq.s32.totalorder %s15, 1
    %p75 = scmp.ne.s32.totalorder %s70, %s72
    %p76 = scmp.eq.s32.totalorder %s15, 0
    %p77 = por %p75, %p76
    %p78 = scmp.ne.s32.totalorder %s70, %s72
    %p79 = scmp.eq.s32.totalorder %s20, 1
    %p80 = por %p78, %p79
    %p81 = scmp.ne.s32.totalorder %s72, %s73
    %p82 = scmp.eq.s32.totalorder %s20, 0
    %p83 = por %p81, %p82
    %p84 = scmp.ne.s32.totalorder %s72, %s73
    %p85 = scmp.eq.s32.totalorder %s21, 1
    %p86 = por %p84, %p85
    %p88 = scmp.ne.s32.totalorder %s73, %s87
    %p89 = scmp.eq.s32.totalorder %s21, 0
    %p90 = por %p88, %p89
    %s91 = ssub.s32 %s15, %s22
    %p92 = scmp.eq.s32.totalorder %s91, 0
    %s94 = sadd.s32 %s93, 1
    %s95 = scalar_select %p92, %s93, %s94
    %p98 = pneg %p92
    %p99 = scmp.eq.s32.totalorder %s15, 1
    %p100 = por %p98, %p99
    %p101 = scmp.ne.s32.totalorder %s93, %s96
    %p102 = scmp.eq.s32.totalorder %s15, 0
    %p103 = por %p101, %p102
    %p104 = scmp.ne.s32.totalorder %s93, %s96
    %p105 = scmp.eq.s32.totalorder %s20, 1
    %p106 = por %p104, %p105
    %p107 = scmp.ne.s32.totalorder %s96, %s97
    %p108 = scmp.eq.s32.totalorder %s20, 0
    %p109 = por %p107, %p108
    %p110 = scmp.ne.s32.totalorder %s96, %s97
    %p111 = scmp.eq.s32.totalorder %s21, 1
    %p112 = por %p110, %p111
    %p114 = scmp.ne.s32.totalorder %s97, %s113
    %p115 = scmp.eq.s32.totalorder %s21, 0
    %p116 = por %p114, %p115
    %s118 = sadd.s32 %s117, 1
    %p121 = scmp.eq.s32.totalorder %s15, 1
    %p122 = scmp.ne.s32.totalorder %s117, %s119
    %p123 = scmp.eq.s32.totalorder %s15, 0
    %p124 = por %p122, %p123
    %p125 = scmp.ne.s32.totalorder %s117, %s119
    %p126 = scmp.eq.s32.totalorder %s20, 1
    %p127 = por %p125, %p126
    %p128 = scmp.ne.s32.totalorder %s119, %s120
    %p129 = scmp.eq.s32.totalorder %s20, 0
    %p130 = por %p128, %p129
    %p131 = scmp.ne.s32.totalorder %s119, %s120
    %p132 = scmp.eq.s32.totalorder %s21, 1
    %p133 = por %p131, %p132
    %p135 = scmp.ne.s32.totalorder %s120, %s134
    %p136 = scmp.eq.s32.totalorder %s21, 0
    %p137 = por %p135, %p136
    %s139 = sadd.s32 %s138, 1
    %p142 = scmp.eq.s32.totalorder %s15, 1
    %p143 = scmp.ne.s32.totalorder %s138, %s140
    %p144 = scmp.eq.s32.totalorder %s15, 0
    %p145 = por %p143, %p144
    %p146 = scmp.ne.s32.totalorder %s138, %s140
    %p147 = scmp.eq.s32.totalorder %s20, 1
    %p148 = por %p146, %p147
    %p149 = scmp.ne.s32.totalorder %s140, %s141
    %p150 = scmp.eq.s32.totalorder %s20, 0
    %p151 = por %p149, %p150
    %p152 = scmp.ne.s32.totalorder %s140, %s141
    %p153 = scmp.eq.s32.totalorder %s21, 1
    %p154 = por %p152, %p153
    %p156 = scmp.ne.s32.totalorder %s141, %s155
    %p157 = scmp.eq.s32.totalorder %s21, 0
    %p158 = por %p156, %p157
    %s159 = ssub.s32 %s15, %s22
    %p160 = scmp.eq.s32.totalorder %s159, 0
    %s162 = sadd.s32 %s161, 1
    %s163 = scalar_select %p160, %s161, %s162
    %p166 = pneg %p160
    %p167 = scmp.eq.s32.totalorder %s15, 1
    %p168 = por %p166, %p167
    %p169 = scmp.ne.s32.totalorder %s161, %s164
    %p170 = scmp.eq.s32.totalorder %s15, 0
    %p171 = por %p169, %p170
    %p172 = scmp.ne.s32.totalorder %s161, %s164
    %p173 = scmp.eq.s32.totalorder %s20, 1
    %p174 = por %p172, %p173
    %p175 = scmp.ne.s32.totalorder %s164, %s165
    %p176 = scmp.eq.s32.totalorder %s20, 0
    %p177 = por %p175, %p176
    %p178 = scmp.ne.s32.totalorder %s164, %s165
    %p179 = scmp.eq.s32.totalorder %s21, 1
    %p180 = por %p178, %p179
    %p182 = scmp.ne.s32.totalorder %s165, %s181
    %p183 = scmp.eq.s32.totalorder %s21, 0
    %p184 = por %p182, %p183
    %s186 = sadd.s32 %s185, 1
    %p189 = scmp.eq.s32.totalorder %s15, 1
    %p190 = scmp.ne.s32.totalorder %s185, %s187
    %p191 = scmp.eq.s32.totalorder %s15, 0
    %p192 = por %p190, %p191
    %p193 = scmp.ne.s32.totalorder %s185, %s187
    %p194 = scmp.eq.s32.totalorder %s20, 1
    %p195 = por %p193, %p194
    %p196 = scmp.ne.s32.totalorder %s187, %s188
    %p197 = scmp.eq.s32.totalorder %s20, 0
    %p198 = por %p196, %p197
    %p199 = scmp.ne.s32.totalorder %s187, %s188
    %p200 = scmp.eq.s32.totalorder %s21, 1
    %p201 = por %p199, %p200
    %p203 = scmp.ne.s32.totalorder %s188, %s202
    %p204 = scmp.eq.s32.totalorder %s21, 0
    %p205 = por %p203, %p204
    %s207 = sadd.s32 %s206, 1
    %p210 = scmp.eq.s32.totalorder %s15, 1
    %p211 = scmp.ne.s32.totalorder %s206, %s208
    %p212 = scmp.eq.s32.totalorder %s15, 0
    %p213 = por %p211, %p212
    %p214 = scmp.ne.s32.totalorder %s206, %s208
    %p215 = scmp.eq.s32.totalorder %s20, 1
    %p216 = por %p214, %p215
    %p217 = scmp.ne.s32.totalorder %s208, %s209
    %p218 = scmp.eq.s32.totalorder %s20, 0
    %p219 = por %p217, %p218
    %p220 = scmp.ne.s32.totalorder %s208, %s209
    %p221 = scmp.eq.s32.totalorder %s21, 1
    %p222 = por %p220, %p221
    %p224 = scmp.ne.s32.totalorder %s209, %s223
    %p225 = scmp.eq.s32.totalorder %s21, 0
    %p226 = por %p224, %p225
    %s227 = ssub.s32 %s15, %s22
    %p228 = scmp.eq.s32.totalorder %s227, 0
    %s230 = sadd.s32 %s229, 1
    %s231 = scalar_select %p228, %s229, %s230
    %p234 = pneg %p228
    %p235 = scmp.eq.s32.totalorder %s15, 1
    %p236 = por %p234, %p235
    %p237 = scmp.ne.s32.totalorder %s229, %s232
    %p238 = scmp.eq.s32.totalorder %s15, 0
    %p239 = por %p237, %p238
    %p240 = scmp.ne.s32.totalorder %s229, %s232
    %p241 = scmp.eq.s32.totalorder %s20, 1
    %p242 = por %p240, %p241
    %p243 = scmp.ne.s32.totalorder %s232, %s233
    %p244 = scmp.eq.s32.totalorder %s20, 0
    %p245 = por %p243, %p244
    %p246 = scmp.ne.s32.totalorder %s232, %s233
    %p247 = scmp.eq.s32.totalorder %s21, 1
    %p248 = por %p246, %p247
    %p250 = scmp.ne.s32.totalorder %s233, %s249
    %p251 = scmp.eq.s32.totalorder %s21, 0
    %p252 = por %p250, %p251
    %p253 = scmp.le.s32.totalorder 1, %s15
    %p254 = scmp.lt.s32.totalorder %s15, 3
    %p255 = pnand %p253, %p254
    %p256 = pneg %p255
    // Predicated region
    $region9: #{tpu_custom_call.1} parent=5 // pred_check
      _
    $region10: #{tpu_custom_call.1} parent=5 // pred_check_branch
      %258 = sbr.rel (%p255) target = $region12
    $region11: #{tpu_custom_call.1} parent=5 // pred_region
      %s259 = ssub.s32 %s15, 1
      // Predicated region
      $region13: #{tpu_custom_call.1} parent=11 // pred_check
        %p260 = pneg %p62
      $region14: #{tpu_custom_call.1} parent=11 // pred_check_branch
        %262 = sbr.rel (%p260) target = $region16
      $region15: #{tpu_custom_call.1} parent=11 // pred_region
        _
      $region16: #{tpu_custom_call.1} parent=11 // pred_fallthru
        _
      // Predicated region
      $region17: #{tpu_custom_call.1} parent=11 // pred_check
        %p263 = pneg %p83
      $region18: #{tpu_custom_call.1} parent=11 // pred_check_branch
        %265 = sbr.rel (%p263) target = $region20
      $region19: #{tpu_custom_call.1} parent=11 // pred_region
        _
      $region20: #{tpu_custom_call.1} parent=11 // pred_fallthru
        _
      // Predicated region
      $region21: #{tpu_custom_call.1} parent=11 // pred_check
        %p266 = pneg %p130
      $region22: #{tpu_custom_call.1} parent=11 // pred_check_branch
        %268 = sbr.rel (%p266) target = $region24
      $region23: #{tpu_custom_call.1} parent=11 // pred_region
        _
      $region24: #{tpu_custom_call.1} parent=11 // pred_fallthru
        _
      // Predicated region
      $region25: #{tpu_custom_call.1} parent=11 // pred_check
        %p269 = pneg %p151
      $region26: #{tpu_custom_call.1} parent=11 // pred_check_branch
        %271 = sbr.rel (%p269) target = $region28
      $region27: #{tpu_custom_call.1} parent=11 // pred_region
        _
      $region28: #{tpu_custom_call.1} parent=11 // pred_fallthru
        _
      // Predicated region
      $region29: #{tpu_custom_call.1} parent=11 // pred_check
        %p272 = pneg %p198
      $region30: #{tpu_custom_call.1} parent=11 // pred_check_branch
        %274 = sbr.rel (%p272) target = $region32
      $region31: #{tpu_custom_call.1} parent=11 // pred_region
        _
      $region32: #{tpu_custom_call.1} parent=11 // pred_fallthru
        _
      // Predicated region
      $region33: #{tpu_custom_call.1} parent=11 // pred_check
        %p275 = pneg %p219
      $region34: #{tpu_custom_call.1} parent=11 // pred_check_branch
        %277 = sbr.rel (%p275) target = $region36
      $region35: #{tpu_custom_call.1} parent=11 // pred_region
        _
      $region36: #{tpu_custom_call.1} parent=11 // pred_fallthru
        _
    $region12: #{tpu_custom_call.1} parent=5 // pred_fallthru
      _
    %p278 = scmp.lt.s32.totalorder %s15, 2
    // Predicated region
    $region37: #{tpu_custom_call.1} parent=5 // pred_check
      %p279 = pneg %p278
    $region38: #{tpu_custom_call.1} parent=5 // pred_check_branch
      %281 = sbr.rel (%p279) target = $region40
    $region39: #{tpu_custom_call.1} parent=5 // pred_region
      // Predicated region
      $region41: #{tpu_custom_call.1} parent=39 // pred_check
        %p282 = pneg %p35
      $region42: #{tpu_custom_call.1} parent=39 // pred_check_branch
        %284 = sbr.rel (%p282) target = $region44
      $region43: #{tpu_custom_call.1} parent=39 // pred_region
        %s285 = smul.u32 8, %s15
        %p286 = scmp.lt.s32.totalorder %s285, 15
        %s287 = scalar_select %p286, %s285, 15
        %s288 = smul.addr %s287, 4
        %s289 = scalar_lea.vmem %s0, %s288
        %s290 = smul.u32 8, %s15
      $region44: #{tpu_custom_call.1} parent=39 // pred_fallthru
        _
      // Predicated region
      $region45: #{tpu_custom_call.1} parent=39 // pred_check
        %p291 = pneg %p103
      $region46: #{tpu_custom_call.1} parent=39 // pred_check_branch
        %293 = sbr.rel (%p291) target = $region48
      $region47: #{tpu_custom_call.1} parent=39 // pred_region
        %s294 = smul.u32 8, %s15
        %p295 = scmp.lt.s32.totalorder %s294, 15
        %s296 = scalar_select %p295, %s294, 15
        %s297 = smul.addr %s296, 4
        %s298 = scalar_lea.vmem %s3, %s297
        %s299 = smul.u32 8, %s15
      $region48: #{tpu_custom_call.1} parent=39 // pred_fallthru
        _
      // Predicated region
      $region49: #{tpu_custom_call.1} parent=39 // pred_check
        %p300 = pneg %p171
      $region50: #{tpu_custom_call.1} parent=39 // pred_check_branch
        %302 = sbr.rel (%p300) target = $region52
      $region51: #{tpu_custom_call.1} parent=39 // pred_region
        %s303 = smul.u32 8, %s15
        %p304 = scmp.lt.s32.totalorder %s303, 15
        %s305 = scalar_select %p304, %s303, 15
        %s306 = smul.addr %s305, 4
        %s307 = scalar_lea.vmem %s6, %s306
        %s308 = smul.u32 8, %s15
      $region52: #{tpu_custom_call.1} parent=39 // pred_fallthru
        _
    $region40: #{tpu_custom_call.1} parent=5 // pred_fallthru
      _
    %p309 = scmp.le.s32.totalorder 1, %s15
    %p310 = scmp.lt.s32.totalorder %s15, 3
    %p311 = pnand %p309, %p310
    %p312 = pneg %p311
    // Predicated region
    $region53: #{tpu_custom_call.1} parent=5 // pred_check
      _
    $region54: #{tpu_custom_call.1} parent=5 // pred_check_branch
      %314 = sbr.rel (%p311) target = $region56
    $region55: #{tpu_custom_call.1} parent=5 // pred_region
      %s315 = ssub.s32 %s15, 1
      %s316 = smul.u32 8, %s20
      %p317 = scmp.lt.s32.totalorder %s316, 15
      %s318 = scalar_select %p317, %s316, 15
      %s319 = smul.addr %s318, 4
      %s320 = scalar_lea.vmem %s0, %s319
      %p321 = pneg %p41
      %p322 = pneg %p38
      %p323 = pneg %p62
      %p324 = pneg %p59
      %p325 = pneg %p83
      %p326 = pneg %p80
      %s327 = smul.u32 8, %s20
      %p328 = scmp.lt.s32.totalorder %s327, 15
      %s329 = scalar_select %p328, %s327, 15
      %s330 = smul.addr %s329, 4
      %s331 = scalar_lea.vmem %s3, %s330
      %p332 = pneg %p109
      %p333 = pneg %p106
      %p334 = pneg %p130
      %p335 = pneg %p127
      %p336 = pneg %p151
      %p337 = pneg %p148
      %s338 = smul.u32 8, %s20
      %p339 = scmp.lt.s32.totalorder %s338, 15
      %s340 = scalar_select %p339, %s338, 15
      %s341 = smul.addr %s340, 4
      %s342 = scalar_lea.vmem %s6, %s341
      %p343 = pneg %p177
      %p344 = pneg %p174
      %p345 = pneg %p198
      %p346 = pneg %p195
      %p347 = pneg %p219
      %p348 = pneg %p216
      %p349 = pneg %p245
      %p350 = pneg %p242
      %s351 = smul.u32 8, %s20
      %p352 = scmp.lt.s32.totalorder %s351, 15
      %s353 = scalar_select %p352, %s351, 15
      %s354 = smul.addr %s353, 8
      %s355 = scalar_lea.vmem %s9, %s354
      %s356 = smul.u32 8, %s20
      %p357 = scmp.lt.s32.totalorder %s356, 15
      %s358 = scalar_select %p357, %s356, 15
      %s359 = smul.addr %s358, 4
      %s360 = scalar_lea.vmem %s0, %s359
      %s361 = smul.u32 8, %s20
      %s362 = smul.u32 8, %s20
      %p363 = scmp.lt.s32.totalorder %s362, 15
      %s364 = scalar_select %p363, %s362, 15
      %s365 = smul.addr %s364, 4
      %s366 = scalar_lea.vmem %s3, %s365
      %s367 = smul.u32 8, %s20
      %s368 = smul.u32 8, %s20
      %p369 = scmp.lt.s32.totalorder %s368, 15
      %s370 = scalar_select %p369, %s368, 15
      %s371 = smul.addr %s370, 4
      %s372 = scalar_lea.vmem %s6, %s371
      %s373 = smul.u32 8, %s20
      %s374 = smul.u32 8, %s20
      %p375 = scmp.lt.s32.totalorder %s374, 15
      %s376 = scalar_select %p375, %s374, 15
      %s377 = smul.addr %s376, 8
      %s378 = scalar_lea.vmem %s9, %s377
      %s379 = smul.u32 8, %s20
      %v381 = vld [vmem:[%s360] sm:$0xf]
      %v382 = vld [vmem:[%s360 + $0x4] sm:$0xf]
      %v383 = vld [vmem:[%s360 + $0x8] sm:$0xf]
      %v384 = vld [vmem:[%s360 + $0xc] sm:$0xf]
      %v385 = vld [vmem:[%s360 + $0x10] sm:$0xf]
      %v386 = vld [vmem:[%s360 + $0x14] sm:$0xf]
      %v387 = vld [vmem:[%s360 + $0x18] sm:$0xf]
      %v388 = vld [vmem:[%s360 + $0x1c] sm:$0xf]
      %v389 = vld [vmem:[%s1] sm:$0xf]
      %v390 = vld [vmem:[%s1 + $0x4] sm:$0xf]
      %v391 = vld [vmem:[%s2] sm:$0x1]
      %v393 = vlaneseq
      %v394 = vshrl.u32 %v393, 7
      %v395 = vsub.s32 0, %v394
      %v396 = vrot.slane %v391, %v395
      %v406 = vunpack.c.l.b16 %v381
      %v407 = vunpack.c.l.b16 %v382
      %v408 = vunpack.c.l.b16 %v383
      %v409 = vunpack.c.l.b16 %v384
      %v410 = vunpack.c.l.b16 %v385
      %v411 = vunpack.c.l.b16 %v386
      %v412 = vunpack.c.l.b16 %v387
      %v413 = vunpack.c.l.b16 %v388
      %v414 = vpack.c.b16 %v407, %v406
      %v415 = vpack.c.b16 %v409, %v408
      %v416 = vpack.c.b16 %v411, %v410
      %v417 = vpack.c.b16 %v413, %v412
      %v420 = vunpack.c.l.b16 %v389
      %v421 = vunpack.c.l.b16 %v390
      %v422 = vpack.c.b16 %v421, %v420
      %vm424 = vcmask 130048
      %v426 = vsel %vm424, %v414, 0
      %v429 = vsel %vm424, %v415, 0
      %v432 = vsel %vm424, %v416, 0
      %v435 = vsel %vm424, %v417, 0
      %437 = vmatprep.subr.bf16.mxu0 0
      %438 = vmatpush1.bf16.msra.mxu0 %v422
      %439 = vmatprep.subr.bf16.mxu0 0
      %440 = vmatpush1.bf16.msra.mxu0 0
      %441 = vmatprep.subr.bf16.mxu0 0
      %442 = vmatpush1.bf16.msra.mxu0 0
      %443 = vmatprep.subr.bf16.mxu0 0
      %444 = vmatpush1.bf16.msra.mxu0 0
      %445 = vmatprep.subr.bf16.mxu0 0
      %446 = vmatpush1.bf16.msra.mxu0 0
      %447 = vmatprep.subr.bf16.mxu0 0
      %448 = vmatpush1.bf16.msra.mxu0 0
      %449 = vmatprep.subr.bf16.mxu0 0
      %450 = vmatpush1.bf16.msra.mxu0 0
      %451 = vmatprep.subr.bf16.mxu0 0
      %452 = vmatpush1.bf16.msra.mxu0 0
      %453 = vmatprep.subr.bf16.mxu0 0
      %454 = vmatpush1.bf16.msra.mxu0 0
      %455 = vmatprep.subr.bf16.mxu0 0
      %456 = vmatpush1.bf16.msra.mxu0 0
      %457 = vmatprep.subr.bf16.mxu0 0
      %458 = vmatpush1.bf16.msra.mxu0 0
      %459 = vmatprep.subr.bf16.mxu0 0
      %460 = vmatpush1.bf16.msra.mxu0 0
      %461 = vmatprep.subr.bf16.mxu0 0
      %462 = vmatpush1.bf16.msra.mxu0 0
      %463 = vmatprep.subr.bf16.mxu0 0
      %464 = vmatpush1.bf16.msra.mxu0 0
      %465 = vmatprep.subr.bf16.mxu0 0
      %466 = vmatpush1.bf16.msra.mxu0 0
      %467 = vmatprep.subr.bf16.mxu0 0
      %468 = vmatpush1.bf16.msra.mxu0 0
      %469 = vmatprep.mubr.bf16.mxu0 0
      %470 = vmatmul.mubr.bf16.gmra.mrb[0].mxu0 %v426
      %v471 = vpop.f32.mrb[0].mxu0
      %v472 = vadd.f32 %v396, %v471
      %v473 = vpop.f32.mrb[0].mxu0
      %v474 = vpop.f32.mrb[0].mxu0
      %v475 = vadd.f32 %v396, %v474
      %v476 = vpop.f32.mrb[0].mxu0
      %477 = vmatprep.mubr.bf16.mxu0 0
      %478 = vmatmul.mubr.bf16.gmra.mrb[0].mxu0 %v429
      %v479 = vpop.f32.mrb[0].mxu0
      %v480 = vadd.f32 %v396, %v479
      %v481 = vpop.f32.mrb[0].mxu0
      %v482 = vpop.f32.mrb[0].mxu0
      %v483 = vadd.f32 %v396, %v482
      %v484 = vpop.f32.mrb[0].mxu0
      %485 = vmatprep.mubr.bf16.mxu0 0
      %486 = vmatmul.mubr.bf16.gmra.mrb[0].mxu0 %v432
      %v487 = vpop.f32.mrb[0].mxu0
      %v488 = vadd.f32 %v396, %v487
      %v489 = vpop.f32.mrb[0].mxu0
      %v490 = vpop.f32.mrb[0].mxu0
      %v491 = vadd.f32 %v396, %v490
      %v492 = vpop.f32.mrb[0].mxu0
      %493 = vmatprep.mubr.bf16.mxu0 0
      %494 = vmatmul.mubr.bf16.gmra.mrb[0].mxu0 %v435
      %v495 = vpop.f32.mrb[0].mxu0
      %v496 = vadd.f32 %v396, %v495
      %v497 = vpop.f32.mrb[0].mxu0
      %v498 = vpop.f32.mrb[0].mxu0
      %v499 = vadd.f32 %v396, %v498
      %v500 = vpop.f32.mrb[0].mxu0
      %501 = vdwg.mxu0
      %v502 = vld [vmem:[%s366] sm:$0xf]
      %v503 = vld [vmem:[%s366 + $0x4] sm:$0xf]
      %v504 = vld [vmem:[%s366 + $0x8] sm:$0xf]
      %v505 = vld [vmem:[%s366 + $0xc] sm:$0xf]
      %v506 = vld [vmem:[%s366 + $0x10] sm:$0xf]
      %v507 = vld [vmem:[%s366 + $0x14] sm:$0xf]
      %v508 = vld [vmem:[%s366 + $0x18] sm:$0xf]
      %v509 = vld [vmem:[%s366 + $0x1c] sm:$0xf]
      %v510 = vunpack.c.l.bf16 %v502
      %v511 = vunpack.c.l.bf16 %v503
      %v512 = vunpack.c.l.bf16 %v504
      %v513 = vunpack.c.l.bf16 %v505
      %v514 = vunpack.c.l.bf16 %v506
      %v515 = vunpack.c.l.bf16 %v507
      %v516 = vunpack.c.l.bf16 %v508
      %v517 = vunpack.c.l.bf16 %v509
      %v518 = vadd.f32 %v472, %v510
      %v519 = vadd.f32 %v475, %v511
      %v520 = vadd.f32 %v480, %v512
      %v521 = vadd.f32 %v483, %v513
      %v522 = vadd.f32 %v488, %v514
      %v523 = vadd.f32 %v491, %v515
      %v524 = vadd.f32 %v496, %v516
      %v525 = vadd.f32 %v499, %v517
      %v526 = vpack.c.bf16 %v519, %v518
      %v527 = vpack.c.bf16 %v521, %v520
      %v528 = vpack.c.bf16 %v523, %v522
      %v529 = vpack.c.bf16 %v525, %v524
      %v530 = vld [vmem:[%s4] sm:$0xf]
      %v531 = vld [vmem:[%s4 + $0x4] sm:$0xf]
      %v532 = vld [vmem:[%s4 + $0x8] sm:$0xf]
      %v533 = vld [vmem:[%s4 + $0xc] sm:$0xf]
      %v534 = vld [vmem:[%s5] sm:$0x1]
      %v536 = vlaneseq
      %v537 = vshrl.u32 %v536, 7
      %v538 = vsub.s32 0, %v537
      %v539 = vrot.slane %v534, %v538
      %v545 = vunpack.c.l.b16 %v530
      %v546 = vunpack.c.l.b16 %v531
      %v547 = vunpack.c.l.b16 %v532
      %v548 = vunpack.c.l.b16 %v533
      %v549 = vpack.c.b16 %v546, %v545
      %v550 = vpack.c.b16 %v548, %v547
      %vm553 = vcmask 261120
      %v555 = vsel %vm553, %v526, 0
      %v558 = vsel %vm553, %v527, 0
      %v561 = vsel %vm553, %v528, 0
      %v564 = vsel %vm553, %v529, 0
      %566 = vmatprep.subr.bf16.mxu0 0
      %567 = vmatpush1.bf16.msra.mxu0 %v549
      %568 = vmatprep.subr.bf16.mxu0 0
      %569 = vmatpush1.bf16.msra.mxu0 %v550
      %570 = vmatprep.subr.bf16.mxu0 0
      %571 = vmatpush1.bf16.msra.mxu0 0
      %572 = vmatprep.subr.bf16.mxu0 0
      %573 = vmatpush1.bf16.msra.mxu0 0
      %574 = vmatprep.subr.bf16.mxu0 0
      %575 = vmatpush1.bf16.msra.mxu0 0
      %576 = vmatprep.subr.bf16.mxu0 0
      %577 = vmatpush1.bf16.msra.mxu0 0
      %578 = vmatprep.subr.bf16.mxu0 0
      %579 = vmatpush1.bf16.msra.mxu0 0
      %580 = vmatprep.subr.bf16.mxu0 0
      %581 = vmatpush1.bf16.msra.mxu0 0
      %582 = vmatprep.subr.bf16.mxu0 0
      %583 = vmatpush1.bf16.msra.mxu0 0
      %584 = vmatprep.subr.bf16.mxu0 0
      %585 = vmatpush1.bf16.msra.mxu0 0
      %586 = vmatprep.subr.bf16.mxu0 0
      %587 = vmatpush1.bf16.msra.mxu0 0
      %588 = vmatprep.subr.bf16.mxu0 0
      %589 = vmatpush1.bf16.msra.mxu0 0
      %590 = vmatprep.subr.bf16.mxu0 0
      %591 = vmatpush1.bf16.msra.mxu0 0
      %592 = vmatprep.subr.bf16.mxu0 0
      %593 = vmatpush1.bf16.msra.mxu0 0
      %594 = vmatprep.subr.bf16.mxu0 0
      %595 = vmatpush1.bf16.msra.mxu0 0
      %596 = vmatprep.subr.bf16.mxu0 0
      %597 = vmatpush1.bf16.msra.mxu0 0
      %598 = vmatprep.mubr.bf16.mxu0 0
      %599 = vmatmul.mubr.bf16.gmra.mrb[0].mxu0 %v555
      %v600 = vpop.f32.mrb[0].mxu0
      %v601 = vadd.f32 %v539, %v600
      %v602 = vpop.f32.mrb[0].mxu0
      %v603 = vpop.f32.mrb[0].mxu0
      %v604 = vadd.f32 %v539, %v603
      %v605 = vpop.f32.mrb[0].mxu0
      %606 = vmatprep.mubr.bf16.mxu0 0
      %607 = vmatmul.mubr.bf16.gmra.mrb[0].mxu0 %v558
      %v608 = vpop.f32.mrb[0].mxu0
      %v609 = vadd.f32 %v539, %v608
      %v610 = vpop.f32.mrb[0].mxu0
      %v611 = vpop.f32.mrb[0].mxu0
      %v612 = vadd.f32 %v539, %v611
      %v613 = vpop.f32.mrb[0].mxu0
      %614 = vmatprep.mubr.bf16.mxu0 0
      %615 = vmatmul.mubr.bf16.gmra.mrb[0].mxu0 %v561
      %v616 = vpop.f32.mrb[0].mxu0
      %v617 = vadd.f32 %v539, %v616
      %v618 = vpop.f32.mrb[0].mxu0
      %v619 = vpop.f32.mrb[0].mxu0
      %v620 = vadd.f32 %v539, %v619
      %v621 = vpop.f32.mrb[0].mxu0
      %622 = vmatprep.mubr.bf16.mxu0 0
      %623 = vmatmul.mubr.bf16.gmra.mrb[0].mxu0 %v564
      %v624 = vpop.f32.mrb[0].mxu0
      %v625 = vadd.f32 %v539, %v624
      %v626 = vpop.f32.mrb[0].mxu0
      %v627 = vpop.f32.mrb[0].mxu0
      %v628 = vadd.f32 %v539, %v627
      %v629 = vpop.f32.mrb[0].mxu0
      %630 = vdwg.mxu0
      %v631 = vld [vmem:[%s372] sm:$0xf]
      %v632 = vld [vmem:[%s372 + $0x4] sm:$0xf]
      %v633 = vld [vmem:[%s372 + $0x8] sm:$0xf]
      %v634 = vld [vmem:[%s372 + $0xc] sm:$0xf]
      %v635 = vld [vmem:[%s372 + $0x10] sm:$0xf]
      %v636 = vld [vmem:[%s372 + $0x14] sm:$0xf]
      %v637 = vld [vmem:[%s372 + $0x18] sm:$0xf]
      %v638 = vld [vmem:[%s372 + $0x1c] sm:$0xf]
      %v639 = vunpack.c.l.bf16 %v631
      %v640 = vunpack.c.l.bf16 %v632
      %v641 = vunpack.c.l.bf16 %v633
      %v642 = vunpack.c.l.bf16 %v634
      %v643 = vunpack.c.l.bf16 %v635
      %v644 = vunpack.c.l.bf16 %v636
      %v645 = vunpack.c.l.bf16 %v637
      %v646 = vunpack.c.l.bf16 %v638
      %v647 = vadd.f32 %v601, %v639
      %v648 = vadd.f32 %v604, %v640
      %v649 = vadd.f32 %v609, %v641
      %v650 = vadd.f32 %v612, %v642
      %v651 = vadd.f32 %v617, %v643
      %v652 = vadd.f32 %v620, %v644
      %v653 = vadd.f32 %v625, %v645
      %v654 = vadd.f32 %v628, %v646
      %v655 = vpack.c.bf16 %v648, %v647
      %v656 = vpack.c.bf16 %v650, %v649
      %v657 = vpack.c.bf16 %v652, %v651
      %v658 = vpack.c.bf16 %v654, %v653
      %v659 = vld [vmem:[%s7] sm:$0xf]
      %v660 = vld [vmem:[%s7 + $0x4] sm:$0xf]
      %v661 = vld [vmem:[%s7 + $0x8] sm:$0xf]
      %v662 = vld [vmem:[%s7 + $0xc] sm:$0xf]
      %v663 = vld [vmem:[%s7 + $0x10] sm:$0xf]
      %v664 = vld [vmem:[%s7 + $0x14] sm:$0xf]
      %v665 = vld [vmem:[%s7 + $0x18] sm:$0xf]
      %v666 = vld [vmem:[%s7 + $0x1c] sm:$0xf]
      %v667 = vld [vmem:[%s8] sm:$0x1]
      %v669 = vlaneseq
      %v670 = vshrl.u32 %v669, 7
      %v671 = vsub.s32 0, %v670
      %v672 = vrot.slane %v667, %v671
      %v682 = vunpack.c.l.b16 %v659
      %v683 = vunpack.c.l.b16 %v660
      %v684 = vunpack.c.l.b16 %v661
      %v685 = vunpack.c.l.b16 %v662
      %v686 = vunpack.c.l.b16 %v663
      %v687 = vunpack.c.l.b16 %v664
      %v688 = vunpack.c.l.b16 %v665
      %v689 = vunpack.c.l.b16 %v666
      %v690 = vpack.c.b16 %v683, %v682
      %v691 = vpack.c.b16 %v685, %v684
      %v692 = vpack.c.b16 %v687, %v686
      %v693 = vpack.c.b16 %v689, %v688
      %vm698 = vcmask 523264
      %v700 = vsel %vm698, %v655, 0
      %v703 = vsel %vm698, %v656, 0
      %v706 = vsel %vm698, %v657, 0
      %v709 = vsel %vm698, %v658, 0
      %711 = vmatprep.subr.bf16.mxu0 0
      %712 = vmatpush1.bf16.msra.mxu0 %v690
      %713 = vmatprep.subr.bf16.mxu0 0
      %714 = vmatpush1.bf16.msra.mxu0 %v691
      %715 = vmatprep.subr.bf16.mxu0 0
      %716 = vmatpush1.bf16.msra.mxu0 %v692
      %717 = vmatprep.subr.bf16.mxu0 0
      %718 = vmatpush1.bf16.msra.mxu0 %v693
      %719 = vmatprep.subr.bf16.mxu0 0
      %720 = vmatpush1.bf16.msra.mxu0 0
      %721 = vmatprep.subr.bf16.mxu0 0
      %722 = vmatpush1.bf16.msra.mxu0 0
      %723 = vmatprep.subr.bf16.mxu0 0
      %724 = vmatpush1.bf16.msra.mxu0 0
      %725 = vmatprep.subr.bf16.mxu0 0
      %726 = vmatpush1.bf16.msra.mxu0 0
      %727 = vmatprep.subr.bf16.mxu0 0
      %728 = vmatpush1.bf16.msra.mxu0 0
      %729 = vmatprep.subr.bf16.mxu0 0
      %730 = vmatpush1.bf16.msra.mxu0 0
      %731 = vmatprep.subr.bf16.mxu0 0
      %732 = vmatpush1.bf16.msra.mxu0 0
      %733 = vmatprep.subr.bf16.mxu0 0
      %734 = vmatpush1.bf16.msra.mxu0 0
      %735 = vmatprep.subr.bf16.mxu0 0
      %736 = vmatpush1.bf16.msra.mxu0 0
      %737 = vmatprep.subr.bf16.mxu0 0
      %738 = vmatpush1.bf16.msra.mxu0 0
      %739 = vmatprep.subr.bf16.mxu0 0
      %740 = vmatpush1.bf16.msra.mxu0 0
      %741 = vmatprep.subr.bf16.mxu0 0
      %742 = vmatpush1.bf16.msra.mxu0 0
      %743 = vmatprep.mubr.bf16.mxu0 0
      %744 = vmatmul.mubr.bf16.gmra.mrb[0].mxu0 %v700
      %v745 = vpop.f32.mrb[0].mxu0
      %v746 = vadd.f32 %v672, %v745
      %v747 = vpop.f32.mrb[0].mxu0
      %v748 = vpop.f32.mrb[0].mxu0
      %v749 = vadd.f32 %v672, %v748
      %v750 = vpop.f32.mrb[0].mxu0
      %751 = vmatprep.mubr.bf16.mxu0 0
      %752 = vmatmul.mubr.bf16.gmra.mrb[0].mxu0 %v703
      %v753 = vpop.f32.mrb[0].mxu0
      %v754 = vadd.f32 %v672, %v753
      %v755 = vpop.f32.mrb[0].mxu0
      %v756 = vpop.f32.mrb[0].mxu0
      %v757 = vadd.f32 %v672, %v756
      %v758 = vpop.f32.mrb[0].mxu0
      %759 = vmatprep.mubr.bf16.mxu0 0
      %760 = vmatmul.mubr.bf16.gmra.mrb[0].mxu0 %v706
      %v761 = vpop.f32.mrb[0].mxu0
      %v762 = vadd.f32 %v672, %v761
      %v763 = vpop.f32.mrb[0].mxu0
      %v764 = vpop.f32.mrb[0].mxu0
      %v765 = vadd.f32 %v672, %v764
      %v766 = vpop.f32.mrb[0].mxu0
      %767 = vmatprep.mubr.bf16.mxu0 0
      %768 = vmatmul.mubr.bf16.gmra.mrb[0].mxu0 %v709
      %v769 = vpop.f32.mrb[0].mxu0
      %v770 = vadd.f32 %v672, %v769
      %v771 = vpop.f32.mrb[0].mxu0
      %v772 = vpop.f32.mrb[0].mxu0
      %v773 = vadd.f32 %v672, %v772
      %v774 = vpop.f32.mrb[0].mxu0
      %775 = vdwg.mxu0
      %vm776 = vcmask 392192
      %777 = vst.msk [vmem:[%s378] sm:$0xff] %vm776, %v746
      %778 = vst.msk [vmem:[%s378 + $0x8] sm:$0xff] %vm776, %v749
      %779 = vst.msk [vmem:[%s378 + $0x10] sm:$0xff] %vm776, %v754
      %780 = vst.msk [vmem:[%s378 + $0x18] sm:$0xff] %vm776, %v757
      %781 = vst.msk [vmem:[%s378 + $0x20] sm:$0xff] %vm776, %v762
      %782 = vst.msk [vmem:[%s378 + $0x28] sm:$0xff] %vm776, %v765
      %783 = vst.msk [vmem:[%s378 + $0x30] sm:$0xff] %vm776, %v770
      %784 = vst.msk [vmem:[%s378 + $0x38] sm:$0xff] %vm776, %v773
      %s785 = smul.u32 8, %s20
      %p786 = scmp.lt.s32.totalorder %s785, 15
      %s787 = scalar_select %p786, %s785, 15
      %s788 = smul.addr %s787, 8
      %s789 = scalar_lea.vmem %s9, %s788
      // Predicated region
      $region57: #{tpu_custom_call.1} parent=55 // pred_check
        %p790 = pneg %p242
      $region58: #{tpu_custom_call.1} parent=55 // pred_check_branch
        %792 = sbr.rel (%p790) target = $region60
      $region59: #{tpu_custom_call.1} parent=55 // pred_region
        %s793 = smul.u32 8, %s20
      $region60: #{tpu_custom_call.1} parent=55 // pred_fallthru
        _
    $region56: #{tpu_custom_call.1} parent=5 // pred_fallthru
      _
    %p794 = scmp.le.s32.totalorder 2, %s15
    // Predicated region
    $region61: #{tpu_custom_call.1} parent=5 // pred_check
      %p795 = pneg %p794
    $region62: #{tpu_custom_call.1} parent=5 // pred_check_branch
      %797 = sbr.rel (%p795) target = $region64
    $region63: #{tpu_custom_call.1} parent=5 // pred_region
      %s798 = ssub.s32 %s15, 2
      // Predicated region
      $region65: #{tpu_custom_call.1} parent=63 // pred_check
        %p799 = pneg %p248
      $region66: #{tpu_custom_call.1} parent=63 // pred_check_branch
        %801 = sbr.rel (%p799) target = $region68
      $region67: #{tpu_custom_call.1} parent=63 // pred_region
        %s802 = smul.u32 8, %s21
        %p803 = scmp.lt.s32.totalorder %s802, 15
        %s804 = scalar_select %p803, %s802, 15
        %s805 = smul.addr %s804, 8
        %s806 = scalar_lea.vmem %s9, %s805
      $region68: #{tpu_custom_call.1} parent=63 // pred_fallthru
        _
    $region64: #{tpu_custom_call.1} parent=5 // pred_fallthru
      _
  $region6: #{tpu_custom_call.1} parent=0 // loop_footer
    %s19 = sadd.s32 1, %s15
  $region7: #{tpu_custom_call.1} parent=0 // loop_footer_branch
    %14 = sbr.rel target = $region3
  $region8: #{tpu_custom_call.1} parent=0 // loop_exit
    _

</llo_original>
